<compile_context>
chip_gen: v5e
topology: v5e:2x2
jax: 0.10.0
libtpu: 0.0.40
codegen_flags: <defaults>
</compile_context>

<pallas_src>
import functools

import jax
import jax.numpy as jnp
from jax.experimental import pallas as pl
from jax.experimental.pallas import tpu as pltpu


def _moving_avg_kernel(x_ref, o_ref, xp_ref, *, kernel_size, stride, pad, l_out):
    L = x_ref.shape[1]
    C = x_ref.shape[2]
    x = x_ref[0]                                         # (L, C) tile

    # Build the edge-replicated, padded series in VMEM scratch.
    xp_ref[pl.ds(pad, L), :] = x
    if pad > 0:
        xp_ref[pl.ds(0, pad), :] = jnp.broadcast_to(x[0:1, :], (pad, C))
        xp_ref[pl.ds(pad + L, pad), :] = jnp.broadcast_to(x[L - 1:L, :], (pad, C))

    # Sliding-window sum: kernel_size lane-dense adds (static, unrolled).
    acc = jnp.zeros((l_out, C), jnp.float32)
    for k in range(kernel_size):
        if stride == 1:
            win = xp_ref[pl.ds(k, l_out), :]
        else:
            win = xp_ref[pl.ds(k, l_out, stride), :]     # strided sublane load
        acc = acc + win.astype(jnp.float32)

    o_ref[0] = (acc * (1.0 / kernel_size)).astype(o_ref.dtype)


def moving_avg(x, kernel_size, stride):
    """x: (B, L, C) float -> (B, L_out, C), matching torch moving_avg.forward."""
    B, L, C = x.shape
    pad = (kernel_size - 1) // 2
    l_pad = L + 2 * pad
    l_out = (l_pad - kernel_size) // stride + 1

    # Channel tile: keep the lane axis dense.  Use the full channel dim when it
    # is not a multiple of 128 (BlockSpec requires full-dim or 128-divisible);
    # otherwise tile at <=512 lanes so per-step VMEM stays small on v7x.
    if C % 128 == 0 and C > 512:
        tc = 512
        while C % tc != 0:
            tc -= 128
    else:
        tc = C
    n_ct = C // tc

    kernel = functools.partial(
        _moving_avg_kernel,
        kernel_size=kernel_size, stride=stride, pad=pad, l_out=l_out)

    bytes_per_elem = x.dtype.itemsize
    return pl.pallas_call(
        kernel,
        out_shape=jax.ShapeDtypeStruct((B, l_out, C), x.dtype),
        grid_spec=pltpu.PrefetchScalarGridSpec(
            num_scalar_prefetch=0,
            grid=(B, n_ct),
            in_specs=[pl.BlockSpec((1, L, tc), lambda b, c: (b, 0, c))],
            out_specs=pl.BlockSpec((1, l_out, tc), lambda b, c: (b, 0, c)),
            scratch_shapes=[pltpu.VMEM((l_pad, tc), x.dtype)],
        ),
        compiler_params=pltpu.CompilerParams(
            dimension_semantics=("parallel", "parallel")),
        cost_estimate=pl.CostEstimate(
            flops=B * l_out * C * kernel_size,
            transcendentals=0,
            bytes_accessed=(B * L * C + B * l_out * C) * bytes_per_elem),
    )(x)


def _moving_avg_ref(x, kernel_size, stride):
    """Pure-JAX reference mirroring the PyTorch module (for validation)."""
    pad = (kernel_size - 1) // 2
    front = jnp.repeat(x[:, 0:1, :], pad, axis=1)
    end = jnp.repeat(x[:, -1:, :], pad, axis=1)
    xp = jnp.concatenate([front, x, end], axis=1)
    l_out = (xp.shape[1] - kernel_size) // stride + 1
    idx = jnp.arange(l_out) * stride
    windows = jnp.stack([xp[:, idx + k, :] for k in range(kernel_size)], axis=0)
    return jnp.mean(windows, axis=0)


if __name__ == "__main__":
    B, L, C = 2, 16, 32
    kernel_size, stride = 5, 1

    key = jax.random.PRNGKey(0)
    x = jax.random.normal(key, (B, L, C), jnp.float32)

    out = moving_avg(x, kernel_size, stride)
    jax.block_until_ready(out)

    ref = _moving_avg_ref(x, kernel_size, stride)
    assert out.shape == ref.shape == (B, L, C)   # stride=1, odd kernel -> L_out == L
    assert jnp.allclose(out, ref, atol=1e-5, rtol=1e-5)
    print("KERNEL_OK")
</pallas_src>

<mosaic_0001>
module attributes {stable_mosaic.version = 11 : i64} {
  func.func @_moving_avg_kernel(%arg0: i32, %arg1: i32, %arg2: memref<1x16x32xf32, #tpu.memory_space<vmem>>, %arg3: memref<1x16x32xf32, #tpu.memory_space<vmem>>, %arg4: memref<20x32xf32, #tpu.memory_space<vmem>>) attributes {dimension_semantics = [#tpu.dimension_semantics<parallel>, #tpu.dimension_semantics<parallel>], iteration_bounds = array<i64: 2, 1>, scalar_prefetch = 0 : i64, scratch_operands = 1 : i64, tpu.core_type = #tpu.core_type<tc>, window_params = [{transform_indices = @transform_0, window_bounds = array<i64: 1, 16, 32>}, {transform_indices = @transform_1, window_bounds = array<i64: 1, 16, 32>}]} {
    %c0 = arith.constant 0 : index
    %c0_0 = arith.constant 0 : index
    %c0_1 = arith.constant 0 : index
    %0 = vector.load %arg2[%c0, %c0_0, %c0_1] : memref<1x16x32xf32, #tpu.memory_space<vmem>>, vector<1x16x32xf32>
    %1 = vector.shape_cast %0 : vector<1x16x32xf32> to vector<16x32xf32>
    %c2 = arith.constant 2 : index
    %c0_2 = arith.constant 0 : index
    %2 = vector.load %arg4[%c2, %c0_2] : memref<20x32xf32, #tpu.memory_space<vmem>>, vector<16x32xf32>
    tpu.vector_store %arg4[%c2, %c0_2], %1 {strides = array<i32>} : memref<20x32xf32, #tpu.memory_space<vmem>>, vector<16x32xf32>,
    %3 = vector.extract_strided_slice %1 {offsets = [0, 0], sizes = [1, 32], strides = [1, 1]} : vector<16x32xf32> to vector<1x32xf32>
    %4 = vector.shape_cast %3 : vector<1x32xf32> to vector<1x32xf32>
    %5 = vector.broadcast %4 : vector<1x32xf32> to vector<2x32xf32>
    %c0_3 = arith.constant 0 : index
    %c0_4 = arith.constant 0 : index
    %6 = vector.load %arg4[%c0_3, %c0_4] : memref<20x32xf32, #tpu.memory_space<vmem>>, vector<2x32xf32>
    tpu.vector_store %arg4[%c0_3, %c0_4], %5 {strides = array<i32>} : memref<20x32xf32, #tpu.memory_space<vmem>>, vector<2x32xf32>,
    %7 = vector.extract_strided_slice %1 {offsets = [15, 0], sizes = [1, 32], strides = [1, 1]} : vector<16x32xf32> to vector<1x32xf32>
    %8 = vector.shape_cast %7 : vector<1x32xf32> to vector<1x32xf32>
    %9 = vector.broadcast %8 : vector<1x32xf32> to vector<2x32xf32>
    %c18 = arith.constant 18 : index
    %c0_5 = arith.constant 0 : index
    %10 = vector.load %arg4[%c18, %c0_5] : memref<20x32xf32, #tpu.memory_space<vmem>>, vector<2x32xf32>
    tpu.vector_store %arg4[%c18, %c0_5], %9 {strides = array<i32>} : memref<20x32xf32, #tpu.memory_space<vmem>>, vector<2x32xf32>,
    %cst = arith.constant 0.000000e+00 : f32
    %11 = vector.broadcast %cst : f32 to vector<16x32xf32>
    %c0_6 = arith.constant 0 : index
    %c0_7 = arith.constant 0 : index
    %12 = vector.load %arg4[%c0_6, %c0_7] : memref<20x32xf32, #tpu.memory_space<vmem>>, vector<16x32xf32>
    %13 = arith.addf %11, %12 : vector<16x32xf32>
    %c1 = arith.constant 1 : index
    %c0_8 = arith.constant 0 : index
    %14 = vector.load %arg4[%c1, %c0_8] : memref<20x32xf32, #tpu.memory_space<vmem>>, vector<16x32xf32>
    %15 = arith.addf %13, %14 : vector<16x32xf32>
    %c2_9 = arith.constant 2 : index
    %c0_10 = arith.constant 0 : index
    %16 = vector.load %arg4[%c2_9, %c0_10] : memref<20x32xf32, #tpu.memory_space<vmem>>, vector<16x32xf32>
    %17 = arith.addf %15, %16 : vector<16x32xf32>
    %c3 = arith.constant 3 : index
    %c0_11 = arith.constant 0 : index
    %18 = vector.load %arg4[%c3, %c0_11] : memref<20x32xf32, #tpu.memory_space<vmem>>, vector<16x32xf32>
    %19 = arith.addf %17, %18 : vector<16x32xf32>
    %c4 = arith.constant 4 : index
    %c0_12 = arith.constant 0 : index
    %20 = vector.load %arg4[%c4, %c0_12] : memref<20x32xf32, #tpu.memory_space<vmem>>, vector<16x32xf32>
    %21 = arith.addf %19, %20 : vector<16x32xf32>
    %cst_13 = arith.constant 2.000000e-01 : f32
    %22 = vector.broadcast %cst_13 : f32 to vector<16x32xf32>
    %23 = arith.mulf %21, %22 : vector<16x32xf32>
    %c0_14 = arith.constant 0 : index
    %c0_15 = arith.constant 0 : index
    %c0_16 = arith.constant 0 : index
    %24 = vector.load %arg3[%c0_14, %c0_15, %c0_16] : memref<1x16x32xf32, #tpu.memory_space<vmem>>, vector<1x16x32xf32>
    %25 = vector.shape_cast %24 : vector<1x16x32xf32> to vector<16x32xf32>
    %26 = vector.shape_cast %23 : vector<16x32xf32> to vector<1x16x32xf32>
    tpu.vector_store %arg3[%c0_14, %c0_15, %c0_16], %26 {strides = array<i32>} : memref<1x16x32xf32, #tpu.memory_space<vmem>>, vector<1x16x32xf32>,
    return
  }
  func.func @transform_0(%arg0: i32, %arg1: i32) -> (i32, i32, i32) {
    %c0_i32 = arith.constant 0 : i32
    %c0_i32_0 = arith.constant 0 : i32
    return %arg0, %c0_i32, %arg1 : i32, i32, i32
  }
  func.func @transform_1(%arg0: i32, %arg1: i32) -> (i32, i32, i32) {
    %c0_i32 = arith.constant 0 : i32
    %c0_i32_0 = arith.constant 0 : i32
    return %arg0, %c0_i32, %arg1 : i32, i32, i32
  }
}

</mosaic_0001>

<llo_original>
// kernel: tpu_custom_call.1
$region0: #{tpu_custom_call.1}
  #allocation0 [shape = 'u32[]', space=smem, size = 0x4, offset = 0x4, fixed_abs, tag = 'smem constant byte address 0x4 - core index']
  #allocation1 [shape = 'u32[72,128]{1,0:T(1,128)}', space=vmem, size = 0x9000, scoped, tag = 'internal scratch']
  #allocation2 [shape = 'f32[20,32]{1,0:T(8,128)}', space=vmem, size = 0x3000, scoped, tag = 'scratch operand']
  %s0 = inlined_call_operand.hbm [shape: f32[2,16,32], index: 0, kind: input, shape index: {}]
  %s1 = inlined_call_operand.hbm [shape: f32[2,16,32], index: 1, kind: output, shape index: {}]
  %s2 = sld [smem:[#allocation0]]
  $region41: #{tpu_custom_call.1} parent=0
    _
  %s4 = ssub.s32 1, %s2
  %s5 = scalar_select 0, %s4, %s2
  $region1: #{tpu_custom_call.1} parent=0
    #allocation3 [shape = 'u8[16384]{0}', space=vmem, size = 0x4000, scoped, tag = 'input window, operand 0']
    #allocation4 [shape = 's32[2]{0}', space=sflag, size = 0x8, scoped, tag = 'scoped memory for tpu_custom_call.1']
    #allocation5 [shape = 's32[2]{0}', space=sflag, size = 0x8, scoped, tag = 'scoped memory for tpu_custom_call.1']
    #allocation6 [shape = 'u8[16384]{0}', space=vmem, size = 0x4000, scoped, tag = 'output window, operand 0']
    %6 = vsyncpa [#allocation4], 0
    %s7 = scalar_lea.sflag [#allocation4], 1
    %8 = vsyncpa %s7, 0
    %9 = vsyncpa [#allocation5], 0
    %s10 = scalar_lea.sflag [#allocation5], 1
    %11 = vsyncpa %s10, 0
    loop: start=0, step=1, limit=4
    $region2: #{tpu_custom_call.1} parent=1 // loop_pre_header
      _
    $region3: #{tpu_custom_call.1} parent=1 // loop_header
      %s13 = sphi 0, %s17
      %p14 = scmp.ge.s32.totalorder %s13, 4
      %s20 = sphi 0, %s32
      %s21 = sphi 0, %s28
      %s22 = sphi 0, %s20
      %s23 = sphi 0, %s21
      %s24 = sphi 0, %s22
      %s25 = sphi 0, %s23
      %s37 = sphi 0, %s39
      %s40 = sphi 0, %s37
      %s41 = sphi 0, %s40
      %s57 = sphi 0, %s41
      %s65 = sphi 0, %s67
      %s68 = sphi 0, %s65
      %s69 = sphi 0, %s68
      %s85 = sphi 0, %s69
    $region4: #{tpu_custom_call.1} parent=1 // loop_header_branch
      %16 = sbr.rel (%p14) target = $region8
    $region5: #{tpu_custom_call.1} parent=1 // loop_body
      %s18 = ssub.s32 %s13, 1
      %s19 = ssub.s32 %s13, 2
      %s26 = sadd.s32 1, %s21
      %p27 = scmp.ge.s32.totalorder %s26, 1
      %s28 = scalar_select %p27, 0, %s26
      %s29 = sadd.s32 1, %s20
      %s30 = scalar_select %p27, %s29, %s20
      %p31 = scmp.ge.s32.totalorder %s30, 2
      %s32 = scalar_select %p31, 0, %s30
      %s33 = ssub.s32 %s20, %s32
      %s34 = ssub.s32 %s21, %s28
      %s35 = sor.u32 %s33, %s34
      %p36 = scmp.eq.s32.totalorder %s35, 0
      %s38 = sadd.s32 %s37, 1
      %s39 = scalar_select %p36, %s37, %s38
      %p42 = pneg %p36
      %p43 = scmp.eq.s32.totalorder %s13, 1
      %p44 = por %p42, %p43
      %p45 = scmp.ne.s32.totalorder %s37, %s40
      %p46 = scmp.eq.s32.totalorder %s13, 0
      %p47 = por %p45, %p46
      %p48 = scmp.ne.s32.totalorder %s37, %s40
      %p49 = scmp.eq.s32.totalorder %s18, 1
      %p50 = por %p48, %p49
      %p51 = scmp.ne.s32.totalorder %s40, %s41
      %p52 = scmp.eq.s32.totalorder %s18, 0
      %p53 = por %p51, %p52
      %p54 = scmp.ne.s32.totalorder %s40, %s41
      %p55 = scmp.eq.s32.totalorder %s19, 1
      %p56 = por %p54, %p55
      %p58 = scmp.ne.s32.totalorder %s41, %s57
      %p59 = scmp.eq.s32.totalorder %s19, 0
      %p60 = por %p58, %p59
      %s61 = ssub.s32 %s20, %s32
      %s62 = ssub.s32 %s21, %s28
      %s63 = sor.u32 %s61, %s62
      %p64 = scmp.eq.s32.totalorder %s63, 0
      %s66 = sadd.s32 %s65, 1
      %s67 = scalar_select %p64, %s65, %s66
      %p70 = pneg %p64
      %p71 = scmp.eq.s32.totalorder %s13, 1
      %p72 = por %p70, %p71
      %p73 = scmp.ne.s32.totalorder %s65, %s68
      %p74 = scmp.eq.s32.totalorder %s13, 0
      %p75 = por %p73, %p74
      %p76 = scmp.ne.s32.totalorder %s65, %s68
      %p77 = scmp.eq.s32.totalorder %s18, 1
      %p78 = por %p76, %p77
      %p79 = scmp.ne.s32.totalorder %s68, %s69
      %p80 = scmp.eq.s32.totalorder %s18, 0
      %p81 = por %p79, %p80
      %p82 = scmp.ne.s32.totalorder %s68, %s69
      %p83 = scmp.eq.s32.totalorder %s19, 1
      %p84 = por %p82, %p83
      %p86 = scmp.ne.s32.totalorder %s69, %s85
      %p87 = scmp.eq.s32.totalorder %s19, 0
      %p88 = por %p86, %p87
      %p89 = scmp.le.s32.totalorder 1, %s13
      %p90 = scmp.lt.s32.totalorder %s13, 3
      %p91 = pnand %p89, %p90
      %p92 = pneg %p91
      // Predicated region
      $region9: #{tpu_custom_call.1} parent=5 // pred_check
        _
      $region10: #{tpu_custom_call.1} parent=5 // pred_check_branch
        %94 = sbr.rel (%p91) target = $region12
      $region11: #{tpu_custom_call.1} parent=5 // pred_region
        %s95 = ssub.s32 %s13, 1
      $region12: #{tpu_custom_call.1} parent=5 // pred_fallthru
        _
      %p96 = scmp.lt.s32.totalorder %s13, 2
      // Predicated region
      $region13: #{tpu_custom_call.1} parent=5 // pred_check
        %p97 = pneg %p96
      $region14: #{tpu_custom_call.1} parent=5 // pred_check_branch
        %99 = sbr.rel (%p97) target = $region16
      $region15: #{tpu_custom_call.1} parent=5 // pred_region
        // Predicated region
        $region17: #{tpu_custom_call.1} parent=15 // pred_check
          %p100 = pneg %p47
        $region18: #{tpu_custom_call.1} parent=15 // pred_check_branch
          %102 = sbr.rel (%p100) target = $region20
        $region19: #{tpu_custom_call.1} parent=15 // pred_region
          %s103 = sand.u32 %s37, 1
          %s104 = scalar_lea.sflag [#allocation4], %s103
          %s105 = sand.u32 %s37, 1
          %s106 = smul.addr %s105, 16
          %s107 = scalar_lea.vmem [#allocation3], %s106
          %109 = vsyncadd %s104, 0
          %s110 = smul.addr %s20, 2
          %s111 = sadd.s32 %s21, %s110
          %s112 = smul.addr %s111, 8
          %s113 = scalar_lea.hbm %s0, %s112
          %s114 = sshll.u32 %s113, 4
          %s115 = int_to_ptr.hbm [resolvable:$true] %s114
          %s116 = sshll.u32 %s107, 4
          %s117 = int_to_ptr.vmem [resolvable:$true] %s116
          %122 = dma.hbm_to_vmem [thread:$0]  %s115, 256, %s117, %s104, 128, 128, 8
        $region20: #{tpu_custom_call.1} parent=15 // pred_fallthru
          _
      $region16: #{tpu_custom_call.1} parent=5 // pred_fallthru
        _
      %p123 = scmp.le.s32.totalorder 1, %s13
      %p124 = scmp.lt.s32.totalorder %s13, 3
      %p125 = pnand %p123, %p124
      %p126 = pneg %p125
      // Predicated region
      $region21: #{tpu_custom_call.1} parent=5 // pred_check
        _
      $region22: #{tpu_custom_call.1} parent=5 // pred_check_branch
        %128 = sbr.rel (%p125) target = $region24
      $region23: #{tpu_custom_call.1} parent=5 // pred_region
        %s129 = ssub.s32 %s13, 1
        %s130 = sand.u32 %s40, 1
        %s131 = scalar_lea.sflag [#allocation4], %s130
        %s132 = sand.u32 %s40, 1
        %s133 = smul.addr %s132, 16
        %s134 = scalar_lea.vmem [#allocation3], %s133
        // Predicated region
        $region25: #{tpu_custom_call.1} parent=23 // pred_check
          %p135 = pneg %p53
        $region26: #{tpu_custom_call.1} parent=23 // pred_check_branch
          %137 = sbr.rel (%p135) target = $region28
        $region27: #{tpu_custom_call.1} parent=23 // pred_region
          %139 = dma.done %s131, 256
        $region28: #{tpu_custom_call.1} parent=23 // pred_fallthru
          _
        %s140 = sand.u32 %s40, 1
        %s141 = scalar_lea.sflag [#allocation4], %s140
        %s142 = sand.u32 %s40, 1
        %s143 = smul.addr %s142, 16
        %s144 = scalar_lea.vmem [#allocation3], %s143
        %p145 = pneg %p53
        %p146 = pneg %p50
        %p147 = pneg %p81
        %p148 = pneg %p78
        %s149 = sand.u32 %s68, 1
        %s150 = scalar_lea.sflag [#allocation5], %s149
        %s151 = sand.u32 %s68, 1
        %s152 = smul.addr %s151, 16
        %s153 = scalar_lea.vmem [#allocation6], %s152
        %v154 = vld [vmem:[%s134] sm:$0xff]
        %v155 = vld [vmem:[%s134 + $0x8] sm:$0xff]
        %vm156 = vcmask 261120
        %157 = vst.msk [vmem:[#allocation2 + $0x2] sm:$0xff] %vm156, %v154
        %158 = vst.msk [vmem:[#allocation2 + $0xa] sm:$0xff] %vm156, %v155
        %v159 = vperm.slane %v154, 0
        %vm160 = vcmask 254976
        %161 = vst.msk [vmem:[#allocation2] sm:$0x3] %vm160, %v159
        %v162 = vperm.slane %v155, 7
        %163 = vst.msk [vmem:[#allocation2 + $0x12] sm:$0x3] %vm160, %v162
        %v164 = vld [vmem:[#allocation2] sm:$0xff]
        %v165 = vld [vmem:[#allocation2 + $0x8] sm:$0xff]
        %v166 = vadd.f32 %v164, 0.0
        %v167 = vadd.f32 %v165, 0.0
        %v168 = vld [vmem:[#allocation2 + $0x1] sm:$0xff]
        %v169 = vld [vmem:[#allocation2 + $0x9] sm:$0xff]
        %v170 = vadd.f32 %v166, %v168
        %v171 = vadd.f32 %v167, %v169
        %v172 = vld [vmem:[#allocation2 + $0x2] sm:$0xff]
        %v173 = vld [vmem:[#allocation2 + $0xa] sm:$0xff]
        %v174 = vadd.f32 %v170, %v172
        %v175 = vadd.f32 %v171, %v173
        %v176 = vld [vmem:[#allocation2 + $0x3] sm:$0xff]
        %v177 = vld [vmem:[#allocation2 + $0xb] sm:$0xff]
        %v178 = vadd.f32 %v174, %v176
        %v179 = vadd.f32 %v175, %v177
        %v180 = vld [vmem:[#allocation2 + $0x4] sm:$0xff]
        %v181 = vld [vmem:[#allocation2 + $0xc] sm:$0xff]
        %v182 = vadd.f32 %v178, %v180
        %v183 = vadd.f32 %v179, %v181
        %v184 = vmul.f32 %v182, 0.2
        %v185 = vmul.f32 %v183, 0.2
        %186 = vst.msk [vmem:[%s153] sm:$0xff] %vm156, %v184
        %187 = vst.msk [vmem:[%s153 + $0x8] sm:$0xff] %vm156, %v185
        %s188 = sand.u32 %s68, 1
        %s189 = scalar_lea.sflag [#allocation5], %s188
        %s190 = sand.u32 %s68, 1
        %s191 = smul.addr %s190, 16
        %s192 = scalar_lea.vmem [#allocation6], %s191
        // Predicated region
        $region29: #{tpu_custom_call.1} parent=23 // pred_check
          %p193 = pneg %p78
        $region30: #{tpu_custom_call.1} parent=23 // pred_check_branch
          %195 = sbr.rel (%p193) target = $region32
        $region31: #{tpu_custom_call.1} parent=23 // pred_region
          %197 = vsyncadd %s189, 0
          %s198 = smul.addr %s22, 2
          %s199 = sadd.s32 %s23, %s198
          %s200 = smul.addr %s199, 8
          %s201 = scalar_lea.hbm %s1, %s200
          %s202 = sshll.u32 %s192, 4
          %s203 = int_to_ptr.vmem [resolvable:$true] %s202
          %s204 = sshll.u32 %s201, 4
          %s205 = int_to_ptr.hbm [resolvable:$true] %s204
          %210 = dma.vmem_to_hbm [thread:$0]  %s203, 256, %s205, %s189, 128, 128, 8
        $region32: #{tpu_custom_call.1} parent=23 // pred_fallthru
          _
      $region24: #{tpu_custom_call.1} parent=5 // pred_fallthru
        _
      %p211 = scmp.le.s32.totalorder 2, %s13
      // Predicated region
      $region33: #{tpu_custom_call.1} parent=5 // pred_check
        %p212 = pneg %p211
      $region34: #{tpu_custom_call.1} parent=5 // pred_check_branch
        %214 = sbr.rel (%p212) target = $region36
      $region35: #{tpu_custom_call.1} parent=5 // pred_region
        %s215 = ssub.s32 %s13, 2
        // Predicated region
        $region37: #{tpu_custom_call.1} parent=35 // pred_check
          %p216 = pneg %p84
        $region38: #{tpu_custom_call.1} parent=35 // pred_check_branch
          %218 = sbr.rel (%p216) target = $region40
        $region39: #{tpu_custom_call.1} parent=35 // pred_region
          %s219 = sand.u32 %s69, 1
          %s220 = scalar_lea.sflag [#allocation5], %s219
          %s221 = sand.u32 %s69, 1
          %s222 = smul.addr %s221, 16
          %s223 = scalar_lea.vmem [#allocation6], %s222
          %225 = dma.done %s220, 256
        $region40: #{tpu_custom_call.1} parent=35 // pred_fallthru
          _
      $region36: #{tpu_custom_call.1} parent=5 // pred_fallthru
        _
    $region6: #{tpu_custom_call.1} parent=1 // loop_footer
      %s17 = sadd.s32 1, %s13
    $region7: #{tpu_custom_call.1} parent=1 // loop_footer_branch
      %12 = sbr.rel target = $region3
    $region8: #{tpu_custom_call.1} parent=1 // loop_exit
      _
    %226 = vsyncpa [#allocation4], 1
    %s227 = scalar_lea.sflag [#allocation4], 1
    %228 = vsyncpa %s227, 1
    %229 = vsyncpa [#allocation5], 1
    %s230 = scalar_lea.sflag [#allocation5], 1
    %231 = vsyncpa %s230, 1

</llo_original>
